<compile_context>
chip_gen: v5e
topology: v5e:2x2
jax: 0.10.0
libtpu: 0.0.40
codegen_flags: <defaults>
</compile_context>

<pallas_src>
import functools
import math

import jax
import jax.numpy as jnp
from jax.experimental import pallas as pl
from jax.experimental.pallas import tpu as pltpu

VMEM = pltpu.MemorySpace.VMEM


def _vspecs(n):
    return [pl.BlockSpec(memory_space=VMEM) for _ in range(n)]


# ----------------------------- fused Pallas kernel --------------------------

def _fused_forward_kernel(
        x_ref, adj_e_ref, adj_o_ref,            # GCN inputs
        enc_w_ref, enc_b_ref,                    # GraphConvolution params
        dec_wt_ref, dec_wb_ref, dec_b_ref,       # decoder MLP (split weights)
        emb_ref, na_ref, nb_ref,                 # embedding table + node ids
        e1_wt_ref, e1_wb_ref, e1_b_ref,          # encoder1 MLP (split weights)
        gnoise_ref, prior_ref,                   # gumbel noise, prior
        rmean_ref, rlogsig_ref, stdz_ref,        # relation params + normal sample
        *rest,                                   # head (w,b)*L, label, loss out
        inv_tau, n_head_layers, head_loss, loss_scale):
    head_refs = rest[:2 * n_head_layers]
    label_ref = rest[2 * n_head_layers]
    loss_ref = rest[2 * n_head_layers + 1]

    f32 = jnp.float32

    # ---- GraphConvolution + ReLU, paired view ------------------------------
    # h = relu(adj @ (x @ W) + b); g_ij = h.view(-1, 2*nhid)
    # Even/odd adj rows give the two halves of each pair directly.
    support = jnp.dot(x_ref[...], enc_w_ref[...], preferred_element_type=f32)
    b_enc = enc_b_ref[...]
    h_e = jnp.maximum(
        jnp.dot(adj_e_ref[...], support, preferred_element_type=f32) + b_enc, 0.0)
    h_o = jnp.maximum(
        jnp.dot(adj_o_ref[...], support, preferred_element_type=f32) + b_enc, 0.0)

    # ---- decoder MLP -> relation logits ------------------------------------
    # g_ij @ W == h_even @ W[:nhid] + h_odd @ W[nhid:]
    logits = (jnp.dot(h_e, dec_wt_ref[...], preferred_element_type=f32)
              + jnp.dot(h_o, dec_wb_ref[...], preferred_element_type=f32)
              + dec_b_ref[...])

    # ---- gumbel softmax (soft samples; hard_gumbel=False) ------------------
    y = (logits + gnoise_ref[...]) * inv_tau
    y = y - jnp.max(y, axis=-1, keepdims=True)
    e = jnp.exp(y)
    z = e * pl.reciprocal(jnp.sum(e, axis=-1, keepdims=True), approx=True)

    # ---- embedding gather (one-hot MXU matmul) + encoder1 ------------------
    P = na_ref.shape[0]
    vocab = emb_ref.shape[0]
    iota = jax.lax.broadcasted_iota(jnp.int32, (P, vocab), 1)
    oh_a = (na_ref[...] == iota).astype(f32)
    oh_b = (nb_ref[...] == iota).astype(f32)
    emb_a = jnp.dot(oh_a, emb_ref[...], preferred_element_type=f32)
    emb_b = jnp.dot(oh_b, emb_ref[...], preferred_element_type=f32)
    h_ij = (jnp.dot(emb_a, e1_wt_ref[...], preferred_element_type=f32)
            + jnp.dot(emb_b, e1_wb_ref[...], preferred_element_type=f32)
            + e1_b_ref[...])

    # ---- relation sample & decoder loss ------------------------------------
    rel_var = rmean_ref[...] + jnp.exp(rlogsig_ref[...]) * stdz_ref[...]
    h_ij0 = jnp.dot(z, rel_var, preferred_element_type=f32)
    dz = z - prior_ref[...]
    kl = jnp.mean(jnp.sum(dz * dz, axis=1, keepdims=True),
                  axis=0, keepdims=True)                               # (1,1)
    diff = h_ij - h_ij0
    l2 = jnp.mean(jnp.mean(diff * diff, axis=1, keepdims=True),
                  axis=0, keepdims=True)                               # (1,1)

    # ---- mode-specific head MLP + loss --------------------------------------
    out = h_ij
    for i in range(n_head_layers):
        if i > 0:
            out = jnp.maximum(out, 0.0)
        w_r = head_refs[2 * i]
        b_r = head_refs[2 * i + 1]
        out = jnp.dot(out, w_r[...], preferred_element_type=f32) + b_r[...]

    lbl = label_ref[...]
    if head_loss == 'mse':
        d_ = out - lbl
        hloss = jnp.mean(d_ * d_, keepdims=True)                       # (1,1)
    else:  # numerically stable BCE-with-logits, mean reduction
        elem = (jnp.maximum(out, 0.0) - out * lbl
                + jnp.log(1.0 + jnp.exp(-jnp.abs(out))))
        hloss = jnp.mean(elem, keepdims=True)                          # (1,1)

    loss_ref[...] = loss_scale * (hloss + kl + l2)


# ---------------------------- parameter setup --------------------------------

def _uniform(key, shape, bound):
    return jax.random.uniform(key, shape, jnp.float32, -bound, bound)


def _mlp_params(key, din, dout, num_layers):
    # assumed MLPLayer: Linear(din,dout) then (ReLU, Linear(dout,dout)) * (n-1)
    layers = []
    keys = jax.random.split(key, 2 * num_layers)
    dims = [din] + [dout] * num_layers
    for i in range(num_layers):
        bound = 1.0 / math.sqrt(dims[i])
        layers.append((_uniform(keys[2 * i], (dims[i], dims[i + 1]), bound),
                       _uniform(keys[2 * i + 1], (dims[i + 1],), bound)))
    return layers


def init_params(key, vocab, nfeat, nhid, ncont, nrel, rel_dim):
    nembed = nhid
    nhid_pair = 2 * nhid
    ks = jax.random.split(key, 11)
    params = {
        'embedding': 0.1 * jax.random.normal(ks[0], (vocab, nfeat), jnp.float32),
        'relations_mean': _uniform(ks[1], (nrel, rel_dim), 0.5 / rel_dim),
        'relations_log_sigma': _uniform(ks[2], (nrel, rel_dim), 0.5 / rel_dim),
        # GraphConvolution(nfeat, nembed)
        'enc_w': _uniform(ks[3], (nfeat, nembed), 1.0 / math.sqrt(nembed)),
        'enc_b': _uniform(ks[4], (nembed,), 1.0 / math.sqrt(nembed)),
        'encoder1': _mlp_params(ks[5], 2 * nfeat, rel_dim, 1),
        'decoder': _mlp_params(ks[6], nhid_pair, nrel, 1),
        'decoder1': _mlp_params(ks[7], rel_dim, 2 * nfeat, 2),
        'decoder2': _mlp_params(ks[8], rel_dim, 1, 2),
        'decoder3': _mlp_params(ks[9], rel_dim, ncont, 2),
        'decoder4': _mlp_params(ks[10], rel_dim, 1, 2),
    }
    return params


# ------------------------------- forward --------------------------------------

def gcn_decoder_forward(params, x, adj, label, mode, nodes, prior=None, *,
                        key, tau=1.0, a=1.0, b=1.0, c=1.0, d=1.0):
    nfeat = params['embedding'].shape[1]
    nhid = params['enc_w'].shape[1]
    nrel = params['relations_mean'].shape[0]
    N = x.shape[0]
    P = N // 2

    # ---- wrapper-side layout plumbing only (no compute un-fused) -----------
    adj_e = adj[0::2]                          # rows 2i   -> h[2i]
    adj_o = adj[1::2]                          # rows 2i+1 -> h[2i+1]
    enc_b = params['enc_b'].reshape(1, -1)

    w_dec, b_dec = params['decoder'][0]
    dec_wt, dec_wb = w_dec[:nhid], w_dec[nhid:]
    dec_b = b_dec.reshape(1, -1)

    w_e1, b_e1 = params['encoder1'][0]
    e1_wt, e1_wb = w_e1[:nfeat], w_e1[nfeat:]
    e1_b = b_e1.reshape(1, -1)

    nodes = jnp.asarray(nodes, jnp.int32)
    na = nodes[:, 0:1]
    nb = nodes[:, 1:2]

    k_gumbel, k_normal = jax.random.split(key)
    gnoise = jax.random.gumbel(k_gumbel, (P, nrel), jnp.float32)
    std_z = jax.random.normal(k_normal, params['relations_mean'].shape, jnp.float32)
    if prior is None:
        prior = jnp.full((P, nrel), 1.0 / nrel, jnp.float32)

    mode_table = {
        'node': ('decoder1', 'mse', a),
        'link': ('decoder2', 'bce', b),
        'diffusion_content': ('decoder3', 'mse', d),
        'diffusion_structure': ('decoder4', 'bce', c),
    }
    if mode not in mode_table:
        raise ValueError('unknown mode!')
    head_key, head_loss, scale = mode_table[mode]
    head_layers = params[head_key]
    head_flat = []
    for w, bb in head_layers:
        head_flat += [w, bb.reshape(1, -1)]

    inputs = [x, adj_e, adj_o, params['enc_w'], enc_b,
              dec_wt, dec_wb, dec_b,
              params['embedding'], na, nb,
              e1_wt, e1_wb, e1_b,
              gnoise, prior,
              params['relations_mean'], params['relations_log_sigma'], std_z,
              *head_flat, label]

    kernel = functools.partial(
        _fused_forward_kernel,
        inv_tau=1.0 / float(tau),
        n_head_layers=len(head_layers),
        head_loss=head_loss,
        loss_scale=float(scale))

    out = pl.pallas_call(
        kernel,
        out_shape=jax.ShapeDtypeStruct((1, 1), jnp.float32),
        in_specs=_vspecs(len(inputs)),
        out_specs=pl.BlockSpec(memory_space=VMEM),
    )(*inputs)
    return out[0, 0]


# -------------------------------- main ----------------------------------------

if __name__ == "__main__":
    # Small deterministic config
    N = 16            # number of graph nodes (even -> N//2 pairs)
    nfeat = 32        # feature / embedding dim
    nhid = 16         # GCN hidden (nembed) -> pair dim = 32
    nrel = 8
    rel_dim = 16
    ncont = 8
    vocab = 64
    P = N // 2

    key = jax.random.PRNGKey(0)
    k_param, k_x, k_adj, k_lbl, k_nodes, k_fwd = jax.random.split(key, 6)

    params = init_params(k_param, vocab, nfeat, nhid, ncont, nrel, rel_dim)

    x = jax.random.normal(k_x, (N, nfeat), jnp.float32)
    adj_raw = jax.random.uniform(k_adj, (N, N), jnp.float32)
    adj = 0.5 * (adj_raw + adj_raw.T)                        # dense symmetric adjacency
    nodes = jax.random.randint(k_nodes, (P, 2), 0, vocab)    # node-id pairs
    label = jax.random.normal(k_lbl, (P, 2 * nfeat), jnp.float32)  # mode='node' target

    loss = gcn_decoder_forward(params, x, adj, label, 'node', nodes,
                               key=k_fwd, tau=1.0, a=1.0, b=1.0, c=1.0, d=1.0)
    jax.block_until_ready(loss)
    assert loss.shape == () and jnp.isfinite(loss)
    print("KERNEL_OK")
</pallas_src>

<mosaic_0001>
module attributes {stable_mosaic.version = 11 : i64} {
  func.func @_fused_forward_kernel(%arg0: memref<16x32xf32, #tpu.memory_space<vmem>>, %arg1: memref<8x16xf32, #tpu.memory_space<vmem>>, %arg2: memref<8x16xf32, #tpu.memory_space<vmem>>, %arg3: memref<32x16xf32, #tpu.memory_space<vmem>>, %arg4: memref<1x16xf32, #tpu.memory_space<vmem>>, %arg5: memref<16x8xf32, #tpu.memory_space<vmem>>, %arg6: memref<16x8xf32, #tpu.memory_space<vmem>>, %arg7: memref<1x8xf32, #tpu.memory_space<vmem>>, %arg8: memref<64x32xf32, #tpu.memory_space<vmem>>, %arg9: memref<8x1xi32, #tpu.memory_space<vmem>>, %arg10: memref<8x1xi32, #tpu.memory_space<vmem>>, %arg11: memref<32x16xf32, #tpu.memory_space<vmem>>, %arg12: memref<32x16xf32, #tpu.memory_space<vmem>>, %arg13: memref<1x16xf32, #tpu.memory_space<vmem>>, %arg14: memref<8x8xf32, #tpu.memory_space<vmem>>, %arg15: memref<8x8xf32, #tpu.memory_space<vmem>>, %arg16: memref<8x16xf32, #tpu.memory_space<vmem>>, %arg17: memref<8x16xf32, #tpu.memory_space<vmem>>, %arg18: memref<8x16xf32, #tpu.memory_space<vmem>>, %arg19: memref<16x64xf32, #tpu.memory_space<vmem>>, %arg20: memref<1x64xf32, #tpu.memory_space<vmem>>, %arg21: memref<64x64xf32, #tpu.memory_space<vmem>>, %arg22: memref<1x64xf32, #tpu.memory_space<vmem>>, %arg23: memref<8x64xf32, #tpu.memory_space<vmem>>, %arg24: memref<1x1xf32, #tpu.memory_space<vmem>>) attributes {dimension_semantics = [], scalar_prefetch = 0 : i64, scratch_operands = 0 : i64, tpu.core_type = #tpu.core_type<tc>} {
    %c0 = arith.constant 0 : index
    %c0_0 = arith.constant 0 : index
    %0 = vector.load %arg0[%c0, %c0_0] : memref<16x32xf32, #tpu.memory_space<vmem>>, vector<16x32xf32>
    %c0_1 = arith.constant 0 : index
    %c0_2 = arith.constant 0 : index
    %1 = vector.load %arg3[%c0_1, %c0_2] : memref<32x16xf32, #tpu.memory_space<vmem>>, vector<32x16xf32>
    %cst = arith.constant dense<0.000000e+00> : vector<16x16xf32>
    %2 = tpu.matmul %0, %1, %cst {dimension_numbers = #tpu.dot_dimension_numbers<[1], [0], [0], [1], [0, 0, 1, 1], [], []>} : vector<16x32xf32>, vector<32x16xf32>, vector<16x16xf32> -> vector<16x16xf32>
    %c0_3 = arith.constant 0 : index
    %c0_4 = arith.constant 0 : index
    %3 = vector.load %arg4[%c0_3, %c0_4] : memref<1x16xf32, #tpu.memory_space<vmem>>, vector<1x16xf32>
    %c0_5 = arith.constant 0 : index
    %c0_6 = arith.constant 0 : index
    %4 = vector.load %arg1[%c0_5, %c0_6] : memref<8x16xf32, #tpu.memory_space<vmem>>, vector<8x16xf32>
    %cst_7 = arith.constant dense<0.000000e+00> : vector<8x16xf32>
    %5 = tpu.matmul %4, %2, %cst_7 {dimension_numbers = #tpu.dot_dimension_numbers<[1], [0], [0], [1], [0, 0, 1, 1], [], []>} : vector<8x16xf32>, vector<16x16xf32>, vector<8x16xf32> -> vector<8x16xf32>
    %6 = vector.broadcast %3 : vector<1x16xf32> to vector<8x16xf32>
    %7 = arith.addf %5, %6 : vector<8x16xf32>
    %cst_8 = arith.constant 0.000000e+00 : f32
    %8 = vector.broadcast %cst_8 : f32 to vector<8x16xf32>
    %9 = arith.maximumf %7, %8 : vector<8x16xf32>
    %c0_9 = arith.constant 0 : index
    %c0_10 = arith.constant 0 : index
    %10 = vector.load %arg2[%c0_9, %c0_10] : memref<8x16xf32, #tpu.memory_space<vmem>>, vector<8x16xf32>
    %cst_11 = arith.constant dense<0.000000e+00> : vector<8x16xf32>
    %11 = tpu.matmul %10, %2, %cst_11 {dimension_numbers = #tpu.dot_dimension_numbers<[1], [0], [0], [1], [0, 0, 1, 1], [], []>} : vector<8x16xf32>, vector<16x16xf32>, vector<8x16xf32> -> vector<8x16xf32>
    %12 = vector.broadcast %3 : vector<1x16xf32> to vector<8x16xf32>
    %13 = arith.addf %11, %12 : vector<8x16xf32>
    %cst_12 = arith.constant 0.000000e+00 : f32
    %14 = vector.broadcast %cst_12 : f32 to vector<8x16xf32>
    %15 = arith.maximumf %13, %14 : vector<8x16xf32>
    %c0_13 = arith.constant 0 : index
    %c0_14 = arith.constant 0 : index
    %16 = vector.load %arg5[%c0_13, %c0_14] : memref<16x8xf32, #tpu.memory_space<vmem>>, vector<16x8xf32>
    %cst_15 = arith.constant dense<0.000000e+00> : vector<8x8xf32>
    %17 = tpu.matmul %9, %16, %cst_15 {dimension_numbers = #tpu.dot_dimension_numbers<[1], [0], [0], [1], [0, 0, 1, 1], [], []>} : vector<8x16xf32>, vector<16x8xf32>, vector<8x8xf32> -> vector<8x8xf32>
    %c0_16 = arith.constant 0 : index
    %c0_17 = arith.constant 0 : index
    %18 = vector.load %arg6[%c0_16, %c0_17] : memref<16x8xf32, #tpu.memory_space<vmem>>, vector<16x8xf32>
    %cst_18 = arith.constant dense<0.000000e+00> : vector<8x8xf32>
    %19 = tpu.matmul %15, %18, %cst_18 {dimension_numbers = #tpu.dot_dimension_numbers<[1], [0], [0], [1], [0, 0, 1, 1], [], []>} : vector<8x16xf32>, vector<16x8xf32>, vector<8x8xf32> -> vector<8x8xf32>
    %20 = arith.addf %17, %19 : vector<8x8xf32>
    %c0_19 = arith.constant 0 : index
    %c0_20 = arith.constant 0 : index
    %21 = vector.load %arg7[%c0_19, %c0_20] : memref<1x8xf32, #tpu.memory_space<vmem>>, vector<1x8xf32>
    %22 = vector.broadcast %21 : vector<1x8xf32> to vector<8x8xf32>
    %23 = arith.addf %20, %22 : vector<8x8xf32>
    %c0_21 = arith.constant 0 : index
    %c0_22 = arith.constant 0 : index
    %24 = vector.load %arg14[%c0_21, %c0_22] : memref<8x8xf32, #tpu.memory_space<vmem>>, vector<8x8xf32>
    %25 = arith.addf %23, %24 : vector<8x8xf32>
    %cst_23 = arith.constant 1.000000e+00 : f32
    %26 = vector.broadcast %cst_23 : f32 to vector<8x8xf32>
    %27 = arith.mulf %25, %26 : vector<8x8xf32>
    %cst_24 = arith.constant dense<0xFF800000> : vector<8xf32>
    %28 = vector.multi_reduction <maximumf>, %27, %cst_24 [1] : vector<8x8xf32> to vector<8xf32>
    %29 = vector.shape_cast %28 : vector<8xf32> to vector<8x1xf32>
    %30 = vector.broadcast %29 : vector<8x1xf32> to vector<8x8xf32>
    %31 = arith.subf %27, %30 : vector<8x8xf32>
    %32 = math.exp %31 : vector<8x8xf32>
    %cst_25 = arith.constant dense<0.000000e+00> : vector<8xf32>
    %33 = vector.multi_reduction <add>, %32, %cst_25 [1] : vector<8x8xf32> to vector<8xf32>
    %34 = vector.shape_cast %33 : vector<8xf32> to vector<8x1xf32>
    %35 = tpu.reciprocal %34 {approx = true} : vector<8x1xf32> -> vector<8x1xf32>
    %36 = vector.broadcast %35 : vector<8x1xf32> to vector<8x8xf32>
    %37 = arith.mulf %32, %36 : vector<8x8xf32>
    %38 = tpu.iota {dimensions = array<i32: 1>} : vector<8x64xi32>
    %c0_26 = arith.constant 0 : index
    %c0_27 = arith.constant 0 : index
    %39 = vector.load %arg9[%c0_26, %c0_27] : memref<8x1xi32, #tpu.memory_space<vmem>>, vector<8x1xi32>
    %40 = vector.broadcast %39 : vector<8x1xi32> to vector<8x64xi32>
    %41 = arith.cmpi eq, %40, %38 : vector<8x64xi32>
    %42 = arith.extui %41 : vector<8x64xi1> to vector<8x64xi32>
    %43 = arith.sitofp %42 : vector<8x64xi32> to vector<8x64xf32>
    %c0_28 = arith.constant 0 : index
    %c0_29 = arith.constant 0 : index
    %44 = vector.load %arg10[%c0_28, %c0_29] : memref<8x1xi32, #tpu.memory_space<vmem>>, vector<8x1xi32>
    %45 = vector.broadcast %44 : vector<8x1xi32> to vector<8x64xi32>
    %46 = arith.cmpi eq, %45, %38 : vector<8x64xi32>
    %47 = arith.extui %46 : vector<8x64xi1> to vector<8x64xi32>
    %48 = arith.sitofp %47 : vector<8x64xi32> to vector<8x64xf32>
    %c0_30 = arith.constant 0 : index
    %c0_31 = arith.constant 0 : index
    %49 = vector.load %arg8[%c0_30, %c0_31] : memref<64x32xf32, #tpu.memory_space<vmem>>, vector<64x32xf32>
    %cst_32 = arith.constant dense<0.000000e+00> : vector<8x32xf32>
    %50 = tpu.matmul %43, %49, %cst_32 {dimension_numbers = #tpu.dot_dimension_numbers<[1], [0], [0], [1], [0, 0, 1, 1], [], []>} : vector<8x64xf32>, vector<64x32xf32>, vector<8x32xf32> -> vector<8x32xf32>
    %c0_33 = arith.constant 0 : index
    %c0_34 = arith.constant 0 : index
    %51 = vector.load %arg8[%c0_33, %c0_34] : memref<64x32xf32, #tpu.memory_space<vmem>>, vector<64x32xf32>
    %cst_35 = arith.constant dense<0.000000e+00> : vector<8x32xf32>
    %52 = tpu.matmul %48, %51, %cst_35 {dimension_numbers = #tpu.dot_dimension_numbers<[1], [0], [0], [1], [0, 0, 1, 1], [], []>} : vector<8x64xf32>, vector<64x32xf32>, vector<8x32xf32> -> vector<8x32xf32>
    %c0_36 = arith.constant 0 : index
    %c0_37 = arith.constant 0 : index
    %53 = vector.load %arg11[%c0_36, %c0_37] : memref<32x16xf32, #tpu.memory_space<vmem>>, vector<32x16xf32>
    %cst_38 = arith.constant dense<0.000000e+00> : vector<8x16xf32>
    %54 = tpu.matmul %50, %53, %cst_38 {dimension_numbers = #tpu.dot_dimension_numbers<[1], [0], [0], [1], [0, 0, 1, 1], [], []>} : vector<8x32xf32>, vector<32x16xf32>, vector<8x16xf32> -> vector<8x16xf32>
    %c0_39 = arith.constant 0 : index
    %c0_40 = arith.constant 0 : index
    %55 = vector.load %arg12[%c0_39, %c0_40] : memref<32x16xf32, #tpu.memory_space<vmem>>, vector<32x16xf32>
    %cst_41 = arith.constant dense<0.000000e+00> : vector<8x16xf32>
    %56 = tpu.matmul %52, %55, %cst_41 {dimension_numbers = #tpu.dot_dimension_numbers<[1], [0], [0], [1], [0, 0, 1, 1], [], []>} : vector<8x32xf32>, vector<32x16xf32>, vector<8x16xf32> -> vector<8x16xf32>
    %57 = arith.addf %54, %56 : vector<8x16xf32>
    %c0_42 = arith.constant 0 : index
    %c0_43 = arith.constant 0 : index
    %58 = vector.load %arg13[%c0_42, %c0_43] : memref<1x16xf32, #tpu.memory_space<vmem>>, vector<1x16xf32>
    %59 = vector.broadcast %58 : vector<1x16xf32> to vector<8x16xf32>
    %60 = arith.addf %57, %59 : vector<8x16xf32>
    %c0_44 = arith.constant 0 : index
    %c0_45 = arith.constant 0 : index
    %61 = vector.load %arg16[%c0_44, %c0_45] : memref<8x16xf32, #tpu.memory_space<vmem>>, vector<8x16xf32>
    %c0_46 = arith.constant 0 : index
    %c0_47 = arith.constant 0 : index
    %62 = vector.load %arg17[%c0_46, %c0_47] : memref<8x16xf32, #tpu.memory_space<vmem>>, vector<8x16xf32>
    %63 = math.exp %62 : vector<8x16xf32>
    %c0_48 = arith.constant 0 : index
    %c0_49 = arith.constant 0 : index
    %64 = vector.load %arg18[%c0_48, %c0_49] : memref<8x16xf32, #tpu.memory_space<vmem>>, vector<8x16xf32>
    %65 = arith.mulf %63, %64 : vector<8x16xf32>
    %66 = arith.addf %61, %65 : vector<8x16xf32>
    %cst_50 = arith.constant dense<0.000000e+00> : vector<8x16xf32>
    %67 = tpu.matmul %37, %66, %cst_50 {dimension_numbers = #tpu.dot_dimension_numbers<[1], [0], [0], [1], [0, 0, 1, 1], [], []>} : vector<8x8xf32>, vector<8x16xf32>, vector<8x16xf32> -> vector<8x16xf32>
    %c0_51 = arith.constant 0 : index
    %c0_52 = arith.constant 0 : index
    %68 = vector.load %arg15[%c0_51, %c0_52] : memref<8x8xf32, #tpu.memory_space<vmem>>, vector<8x8xf32>
    %69 = arith.subf %37, %68 : vector<8x8xf32>
    %70 = arith.mulf %69, %69 : vector<8x8xf32>
    %cst_53 = arith.constant dense<0.000000e+00> : vector<8xf32>
    %71 = vector.multi_reduction <add>, %70, %cst_53 [1] : vector<8x8xf32> to vector<8xf32>
    %72 = vector.shape_cast %71 : vector<8xf32> to vector<8x1xf32>
    %cst_54 = arith.constant dense<0.000000e+00> : vector<1xf32>
    %73 = vector.multi_reduction <add>, %72, %cst_54 [0] : vector<8x1xf32> to vector<1xf32>
    %74 = vector.shape_cast %73 : vector<1xf32> to vector<1x1xf32>
    %cst_55 = arith.constant 8.000000e+00 : f32
    %75 = vector.broadcast %cst_55 : f32 to vector<1x1xf32>
    %76 = arith.divf %74, %75 : vector<1x1xf32>
    %77 = arith.subf %60, %67 : vector<8x16xf32>
    %78 = arith.mulf %77, %77 : vector<8x16xf32>
    %cst_56 = arith.constant dense<0.000000e+00> : vector<8xf32>
    %79 = vector.multi_reduction <add>, %78, %cst_56 [1] : vector<8x16xf32> to vector<8xf32>
    %80 = vector.shape_cast %79 : vector<8xf32> to vector<8x1xf32>
    %cst_57 = arith.constant 1.600000e+01 : f32
    %81 = vector.broadcast %cst_57 : f32 to vector<8x1xf32>
    %82 = arith.divf %80, %81 : vector<8x1xf32>
    %cst_58 = arith.constant dense<0.000000e+00> : vector<1xf32>
    %83 = vector.multi_reduction <add>, %82, %cst_58 [0] : vector<8x1xf32> to vector<1xf32>
    %84 = vector.shape_cast %83 : vector<1xf32> to vector<1x1xf32>
    %cst_59 = arith.constant 8.000000e+00 : f32
    %85 = vector.broadcast %cst_59 : f32 to vector<1x1xf32>
    %86 = arith.divf %84, %85 : vector<1x1xf32>
    %c0_60 = arith.constant 0 : index
    %c0_61 = arith.constant 0 : index
    %87 = vector.load %arg19[%c0_60, %c0_61] : memref<16x64xf32, #tpu.memory_space<vmem>>, vector<16x64xf32>
    %cst_62 = arith.constant dense<0.000000e+00> : vector<8x64xf32>
    %88 = tpu.matmul %60, %87, %cst_62 {dimension_numbers = #tpu.dot_dimension_numbers<[1], [0], [0], [1], [0, 0, 1, 1], [], []>} : vector<8x16xf32>, vector<16x64xf32>, vector<8x64xf32> -> vector<8x64xf32>
    %c0_63 = arith.constant 0 : index
    %c0_64 = arith.constant 0 : index
    %89 = vector.load %arg20[%c0_63, %c0_64] : memref<1x64xf32, #tpu.memory_space<vmem>>, vector<1x64xf32>
    %90 = vector.broadcast %89 : vector<1x64xf32> to vector<8x64xf32>
    %91 = arith.addf %88, %90 : vector<8x64xf32>
    %cst_65 = arith.constant 0.000000e+00 : f32
    %92 = vector.broadcast %cst_65 : f32 to vector<8x64xf32>
    %93 = arith.maximumf %91, %92 : vector<8x64xf32>
    %c0_66 = arith.constant 0 : index
    %c0_67 = arith.constant 0 : index
    %94 = vector.load %arg21[%c0_66, %c0_67] : memref<64x64xf32, #tpu.memory_space<vmem>>, vector<64x64xf32>
    %cst_68 = arith.constant dense<0.000000e+00> : vector<8x64xf32>
    %95 = tpu.matmul %93, %94, %cst_68 {dimension_numbers = #tpu.dot_dimension_numbers<[1], [0], [0], [1], [0, 0, 1, 1], [], []>} : vector<8x64xf32>, vector<64x64xf32>, vector<8x64xf32> -> vector<8x64xf32>
    %c0_69 = arith.constant 0 : index
    %c0_70 = arith.constant 0 : index
    %96 = vector.load %arg22[%c0_69, %c0_70] : memref<1x64xf32, #tpu.memory_space<vmem>>, vector<1x64xf32>
    %97 = vector.broadcast %96 : vector<1x64xf32> to vector<8x64xf32>
    %98 = arith.addf %95, %97 : vector<8x64xf32>
    %c0_71 = arith.constant 0 : index
    %c0_72 = arith.constant 0 : index
    %99 = vector.load %arg23[%c0_71, %c0_72] : memref<8x64xf32, #tpu.memory_space<vmem>>, vector<8x64xf32>
    %100 = arith.subf %98, %99 : vector<8x64xf32>
    %101 = arith.mulf %100, %100 : vector<8x64xf32>
    %102 = vector.shape_cast %101 : vector<8x64xf32> to vector<1x8x64xf32>
    %cst_73 = arith.constant dense<0.000000e+00> : vector<1xf32>
    %103 = vector.multi_reduction <add>, %102, %cst_73 [1, 2] : vector<1x8x64xf32> to vector<1xf32>
    %104 = vector.shape_cast %103 : vector<1xf32> to vector<1x1x1xf32>
    %105 = vector.extract %104[0, 0, 0] : f32 from vector<1x1x1xf32>
    %106 = vector.broadcast %105 : f32 to vector<1x1xf32>
    %cst_74 = arith.constant 5.120000e+02 : f32
    %107 = vector.broadcast %cst_74 : f32 to vector<1x1xf32>
    %108 = arith.divf %106, %107 : vector<1x1xf32>
    %109 = arith.addf %108, %76 : vector<1x1xf32>
    %110 = arith.addf %109, %86 : vector<1x1xf32>
    %cst_75 = arith.constant 1.000000e+00 : f32
    %111 = vector.broadcast %cst_75 : f32 to vector<1x1xf32>
    %112 = arith.mulf %111, %110 : vector<1x1xf32>
    %c0_76 = arith.constant 0 : index
    %c0_77 = arith.constant 0 : index
    %113 = vector.load %arg24[%c0_76, %c0_77] : memref<1x1xf32, #tpu.memory_space<vmem>>, vector<1x1xf32>
    tpu.vector_store %arg24[%c0_76, %c0_77], %112 {strides = array<i32>} : memref<1x1xf32, #tpu.memory_space<vmem>>, vector<1x1xf32>,
    return
  }
}

</mosaic_0001>

<llo_original>
// kernel: tpu_custom_call.1
$region0: #{tpu_custom_call.1}
  #allocation0 [shape = 'u32[]', space=smem, size = 0x4, offset = 0x4, fixed_abs, tag = 'smem constant byte address 0x4 - core index']
  #allocation1 [shape = 'u32[72,128]{1,0:T(1,128)}', space=vmem, size = 0x9000, scoped, tag = 'internal scratch']
  %s0 = inlined_call_operand.vmem [shape: f32[16,32], index: 0, kind: input, shape index: {}]
  %s1 = inlined_call_operand.vmem [shape: f32[8,16], index: 1, kind: input, shape index: {}]
  %s2 = inlined_call_operand.vmem [shape: f32[8,16], index: 2, kind: input, shape index: {}]
  %s3 = inlined_call_operand.vmem [shape: f32[32,16], index: 3, kind: input, shape index: {}]
  %s4 = inlined_call_operand.vmem [shape: f32[1,16], index: 4, kind: input, shape index: {}]
  %s5 = inlined_call_operand.vmem [shape: f32[16,8], index: 5, kind: input, shape index: {}]
  %s6 = inlined_call_operand.vmem [shape: f32[16,8], index: 6, kind: input, shape index: {}]
  %s7 = inlined_call_operand.vmem [shape: f32[1,8], index: 7, kind: input, shape index: {}]
  %s8 = inlined_call_operand.vmem [shape: f32[64,32], index: 8, kind: input, shape index: {}]
  %s9 = inlined_call_operand.vmem [shape: s32[8,1], index: 9, kind: input, shape index: {}]
  %s10 = inlined_call_operand.vmem [shape: s32[8,1], index: 10, kind: input, shape index: {}]
  %s11 = inlined_call_operand.vmem [shape: f32[32,16], index: 11, kind: input, shape index: {}]
  %s12 = inlined_call_operand.vmem [shape: f32[32,16], index: 12, kind: input, shape index: {}]
  %s13 = inlined_call_operand.vmem [shape: f32[1,16], index: 13, kind: input, shape index: {}]
  %s14 = inlined_call_operand.vmem [shape: f32[8,8], index: 14, kind: input, shape index: {}]
  %s15 = inlined_call_operand.vmem [shape: f32[8,8], index: 15, kind: input, shape index: {}]
  %s16 = inlined_call_operand.vmem [shape: f32[8,16], index: 16, kind: input, shape index: {}]
  %s17 = inlined_call_operand.vmem [shape: f32[8,16], index: 17, kind: input, shape index: {}]
  %s18 = inlined_call_operand.vmem [shape: f32[8,16], index: 18, kind: input, shape index: {}]
  %s19 = inlined_call_operand.vmem [shape: f32[16,64], index: 19, kind: input, shape index: {}]
  %s20 = inlined_call_operand.vmem [shape: f32[1,64], index: 20, kind: input, shape index: {}]
  %s21 = inlined_call_operand.vmem [shape: f32[64,64], index: 21, kind: input, shape index: {}]
  %s22 = inlined_call_operand.vmem [shape: f32[1,64], index: 22, kind: input, shape index: {}]
  %s23 = inlined_call_operand.vmem [shape: f32[8,64], index: 23, kind: input, shape index: {}]
  %s24 = inlined_call_operand.hbm [shape: f32[1,1], index: 24, kind: output, shape index: {}]
  %s25 = sld [smem:[#allocation0]]
  $region106: #{tpu_custom_call.1} parent=0
    _
  %s27 = ssub.s32 1, %s25
  %s28 = scalar_select 0, %s27, %s25
  $region1: #{tpu_custom_call.1} parent=0
    #allocation2 [shape = 'u8[512]{0}', space=vmem, size = 0x400, scoped, tag = 'output window, operand 0, single buffered']
    #allocation3 [shape = 's32[1]{0}', space=sflag, size = 0x4, scoped, tag = 'scoped memory for tpu_custom_call.1']
    %29 = vsyncpa [#allocation3], 0
    // Predicated region
    $region2: #{tpu_custom_call.1} parent=1 // pred_check
      _
    $region3: #{tpu_custom_call.1} parent=1 // pred_check_branch
      %31 = sbr.rel (0) target = $region5
    $region4: #{tpu_custom_call.1} parent=1 // pred_region
      _
    $region5: #{tpu_custom_call.1} parent=1 // pred_fallthru
      _
    // Predicated region
    $region6: #{tpu_custom_call.1} parent=1 // pred_check
      _
    $region7: #{tpu_custom_call.1} parent=1 // pred_check_branch
      %33 = sbr.rel (0) target = $region9
    $region8: #{tpu_custom_call.1} parent=1 // pred_region
      _
    $region9: #{tpu_custom_call.1} parent=1 // pred_fallthru
      _
    // Predicated region
    $region10: #{tpu_custom_call.1} parent=1 // pred_check
      _
    $region11: #{tpu_custom_call.1} parent=1 // pred_check_branch
      %35 = sbr.rel (0) target = $region13
    $region12: #{tpu_custom_call.1} parent=1 // pred_region
      _
    $region13: #{tpu_custom_call.1} parent=1 // pred_fallthru
      _
    // Predicated region
    $region14: #{tpu_custom_call.1} parent=1 // pred_check
      _
    $region15: #{tpu_custom_call.1} parent=1 // pred_check_branch
      %37 = sbr.rel (0) target = $region17
    $region16: #{tpu_custom_call.1} parent=1 // pred_region
      _
    $region17: #{tpu_custom_call.1} parent=1 // pred_fallthru
      _
    // Predicated region
    $region18: #{tpu_custom_call.1} parent=1 // pred_check
      _
    $region19: #{tpu_custom_call.1} parent=1 // pred_check_branch
      %39 = sbr.rel (0) target = $region21
    $region20: #{tpu_custom_call.1} parent=1 // pred_region
      _
    $region21: #{tpu_custom_call.1} parent=1 // pred_fallthru
      _
    // Predicated region
    $region22: #{tpu_custom_call.1} parent=1 // pred_check
      _
    $region23: #{tpu_custom_call.1} parent=1 // pred_check_branch
      %41 = sbr.rel (0) target = $region25
    $region24: #{tpu_custom_call.1} parent=1 // pred_region
      _
    $region25: #{tpu_custom_call.1} parent=1 // pred_fallthru
      _
    // Predicated region
    $region26: #{tpu_custom_call.1} parent=1 // pred_check
      _
    $region27: #{tpu_custom_call.1} parent=1 // pred_check_branch
      %43 = sbr.rel (0) target = $region29
    $region28: #{tpu_custom_call.1} parent=1 // pred_region
      _
    $region29: #{tpu_custom_call.1} parent=1 // pred_fallthru
      _
    // Predicated region
    $region30: #{tpu_custom_call.1} parent=1 // pred_check
      _
    $region31: #{tpu_custom_call.1} parent=1 // pred_check_branch
      %45 = sbr.rel (0) target = $region33
    $region32: #{tpu_custom_call.1} parent=1 // pred_region
      _
    $region33: #{tpu_custom_call.1} parent=1 // pred_fallthru
      _
    // Predicated region
    $region34: #{tpu_custom_call.1} parent=1 // pred_check
      _
    $region35: #{tpu_custom_call.1} parent=1 // pred_check_branch
      %47 = sbr.rel (0) target = $region37
    $region36: #{tpu_custom_call.1} parent=1 // pred_region
      _
    $region37: #{tpu_custom_call.1} parent=1 // pred_fallthru
      _
    // Predicated region
    $region38: #{tpu_custom_call.1} parent=1 // pred_check
      _
    $region39: #{tpu_custom_call.1} parent=1 // pred_check_branch
      %49 = sbr.rel (0) target = $region41
    $region40: #{tpu_custom_call.1} parent=1 // pred_region
      _
    $region41: #{tpu_custom_call.1} parent=1 // pred_fallthru
      _
    // Predicated region
    $region42: #{tpu_custom_call.1} parent=1 // pred_check
      _
    $region43: #{tpu_custom_call.1} parent=1 // pred_check_branch
      %51 = sbr.rel (0) target = $region45
    $region44: #{tpu_custom_call.1} parent=1 // pred_region
      _
    $region45: #{tpu_custom_call.1} parent=1 // pred_fallthru
      _
    // Predicated region
    $region46: #{tpu_custom_call.1} parent=1 // pred_check
      _
    $region47: #{tpu_custom_call.1} parent=1 // pred_check_branch
      %53 = sbr.rel (0) target = $region49
    $region48: #{tpu_custom_call.1} parent=1 // pred_region
      _
    $region49: #{tpu_custom_call.1} parent=1 // pred_fallthru
      _
    // Predicated region
    $region50: #{tpu_custom_call.1} parent=1 // pred_check
      _
    $region51: #{tpu_custom_call.1} parent=1 // pred_check_branch
      %55 = sbr.rel (0) target = $region53
    $region52: #{tpu_custom_call.1} parent=1 // pred_region
      _
    $region53: #{tpu_custom_call.1} parent=1 // pred_fallthru
      _
    // Predicated region
    $region54: #{tpu_custom_call.1} parent=1 // pred_check
      _
    $region55: #{tpu_custom_call.1} parent=1 // pred_check_branch
      %57 = sbr.rel (0) target = $region57
    $region56: #{tpu_custom_call.1} parent=1 // pred_region
      _
    $region57: #{tpu_custom_call.1} parent=1 // pred_fallthru
      _
    // Predicated region
    $region58: #{tpu_custom_call.1} parent=1 // pred_check
      _
    $region59: #{tpu_custom_call.1} parent=1 // pred_check_branch
      %59 = sbr.rel (0) target = $region61
    $region60: #{tpu_custom_call.1} parent=1 // pred_region
      _
    $region61: #{tpu_custom_call.1} parent=1 // pred_fallthru
      _
    // Predicated region
    $region62: #{tpu_custom_call.1} parent=1 // pred_check
      _
    $region63: #{tpu_custom_call.1} parent=1 // pred_check_branch
      %61 = sbr.rel (0) target = $region65
    $region64: #{tpu_custom_call.1} parent=1 // pred_region
      _
    $region65: #{tpu_custom_call.1} parent=1 // pred_fallthru
      _
    // Predicated region
    $region66: #{tpu_custom_call.1} parent=1 // pred_check
      _
    $region67: #{tpu_custom_call.1} parent=1 // pred_check_branch
      %63 = sbr.rel (0) target = $region69
    $region68: #{tpu_custom_call.1} parent=1 // pred_region
      _
    $region69: #{tpu_custom_call.1} parent=1 // pred_fallthru
      _
    // Predicated region
    $region70: #{tpu_custom_call.1} parent=1 // pred_check
      _
    $region71: #{tpu_custom_call.1} parent=1 // pred_check_branch
      %65 = sbr.rel (0) target = $region73
    $region72: #{tpu_custom_call.1} parent=1 // pred_region
      _
    $region73: #{tpu_custom_call.1} parent=1 // pred_fallthru
      _
    // Predicated region
    $region74: #{tpu_custom_call.1} parent=1 // pred_check
      _
    $region75: #{tpu_custom_call.1} parent=1 // pred_check_branch
      %67 = sbr.rel (0) target = $region77
    $region76: #{tpu_custom_call.1} parent=1 // pred_region
      _
    $region77: #{tpu_custom_call.1} parent=1 // pred_fallthru
      _
    // Predicated region
    $region78: #{tpu_custom_call.1} parent=1 // pred_check
      _
    $region79: #{tpu_custom_call.1} parent=1 // pred_check_branch
      %69 = sbr.rel (0) target = $region81
    $region80: #{tpu_custom_call.1} parent=1 // pred_region
      _
    $region81: #{tpu_custom_call.1} parent=1 // pred_fallthru
      _
    // Predicated region
    $region82: #{tpu_custom_call.1} parent=1 // pred_check
      _
    $region83: #{tpu_custom_call.1} parent=1 // pred_check_branch
      %71 = sbr.rel (0) target = $region85
    $region84: #{tpu_custom_call.1} parent=1 // pred_region
      _
    $region85: #{tpu_custom_call.1} parent=1 // pred_fallthru
      _
    // Predicated region
    $region86: #{tpu_custom_call.1} parent=1 // pred_check
      _
    $region87: #{tpu_custom_call.1} parent=1 // pred_check_branch
      %73 = sbr.rel (0) target = $region89
    $region88: #{tpu_custom_call.1} parent=1 // pred_region
      _
    $region89: #{tpu_custom_call.1} parent=1 // pred_fallthru
      _
    // Predicated region
    $region90: #{tpu_custom_call.1} parent=1 // pred_check
      _
    $region91: #{tpu_custom_call.1} parent=1 // pred_check_branch
      %75 = sbr.rel (0) target = $region93
    $region92: #{tpu_custom_call.1} parent=1 // pred_region
      _
    $region93: #{tpu_custom_call.1} parent=1 // pred_fallthru
      _
    // Predicated region
    $region94: #{tpu_custom_call.1} parent=1 // pred_check
      _
    $region95: #{tpu_custom_call.1} parent=1 // pred_check_branch
      %77 = sbr.rel (0) target = $region97
    $region96: #{tpu_custom_call.1} parent=1 // pred_region
      _
    $region97: #{tpu_custom_call.1} parent=1 // pred_fallthru
      _
    %v78 = vld [vmem:[%s0] sm:$0xff]
    %v79 = vld [vmem:[%s0 + $0x8] sm:$0xff]
    %v80 = vld [vmem:[%s3] sm:$0xff]
    %v81 = vld [vmem:[%s3 + $0x8] sm:$0xff]
    %v82 = vld [vmem:[%s3 + $0x10] sm:$0xff]
    %v83 = vld [vmem:[%s3 + $0x18] sm:$0xff]
    %vm84 = vcmask 261120
    %v86 = vsel %vm84, %v78, 0
    %v89 = vsel %vm84, %v79, 0
    %91 = vmatpush.msra.mxu0 0.0
    %92 = vmatpush.msra.mxu0 0.0
    %93 = vmatpush.msra.mxu0 0.0
    %94 = vmatpush.msra.mxu0 0.0
    %95 = vmatpush.msra.mxu0 0.0
    %96 = vmatpush.msra.mxu0 0.0
    %97 = vmatpush.msra.mxu0 0.0
    %98 = vmatpush.msra.mxu0 0.0
    %99 = vmatpush.msra.mxu0 0.0
    %100 = vmatpush.msra.mxu0 0.0
    %101 = vmatpush.msra.mxu0 0.0
    %102 = vmatpush.msra.mxu0 0.0
    %103 = vmatpush.msra.mxu0 %v83
    %104 = vmatpush.msra.mxu0 %v82
    %105 = vmatpush.msra.mxu0 %v81
    %106 = vmatpush.msra.mxu0 %v80
    %107 = vmatmul.f32.gmra.mxu0 %v86
    %v108 = vpop.f32.mrf.mxu0
    %v109 = vadd.f32 0.0, %v108
    %110 = vmatmul.f32.gmra.mxu0 %v89
    %v111 = vpop.f32.mrf.mxu0
    %v112 = vadd.f32 0.0, %v111
    %113 = vdwg.mxu0
    %v114 = vld [vmem:[%s4] sm:$0x1]
    %v115 = vld [vmem:[%s1] sm:$0xff]
    %v117 = vperm.slane %v114, 0
    %vm119 = vcmask 130048
    %v121 = vsel %vm119, %v115, 0
    %123 = vmatpush.msra.mxu0 0.0
    %124 = vmatpush.msra.mxu0 0.0
    %125 = vmatpush.msra.mxu0 0.0
    %126 = vmatpush.msra.mxu0 0.0
    %127 = vmatpush.msra.mxu0 0.0
    %128 = vmatpush.msra.mxu0 0.0
    %129 = vmatpush.msra.mxu0 0.0
    %130 = vmatpush.msra.mxu0 0.0
    %131 = vmatpush.msra.mxu0 0.0
    %132 = vmatpush.msra.mxu0 0.0
    %133 = vmatpush.msra.mxu0 0.0
    %134 = vmatpush.msra.mxu0 0.0
    %135 = vmatpush.msra.mxu0 0.0
    %136 = vmatpush.msra.mxu0 0.0
    %137 = vmatpush.msra.mxu0 %v112
    %138 = vmatpush.msra.mxu0 %v109
    %139 = vmatmul.f32.gmra.mxu0 %v121
    %v140 = vpop.f32.mrf.mxu0
    %v141 = vadd.f32 %v117, %v140
    %142 = vdwg.mxu0
    %v143 = vmax.f32 %v141, 0.0
    %v144 = vld [vmem:[%s2] sm:$0xff]
    %v146 = vsel %vm119, %v144, 0
    %148 = vmatpush.msra.mxu0 0.0
    %149 = vmatpush.msra.mxu0 0.0
    %150 = vmatpush.msra.mxu0 0.0
    %151 = vmatpush.msra.mxu0 0.0
    %152 = vmatpush.msra.mxu0 0.0
    %153 = vmatpush.msra.mxu0 0.0
    %154 = vmatpush.msra.mxu0 0.0
    %155 = vmatpush.msra.mxu0 0.0
    %156 = vmatpush.msra.mxu0 0.0
    %157 = vmatpush.msra.mxu0 0.0
    %158 = vmatpush.msra.mxu0 0.0
    %159 = vmatpush.msra.mxu0 0.0
    %160 = vmatpush.msra.mxu0 0.0
    %161 = vmatpush.msra.mxu0 0.0
    %162 = vmatpush.msra.mxu0 %v112
    %163 = vmatpush.msra.mxu0 %v109
    %164 = vmatmul.f32.gmra.mxu0 %v146
    %v165 = vpop.f32.mrf.mxu0
    %v166 = vadd.f32 %v117, %v165
    %167 = vdwg.mxu0
    %v168 = vmax.f32 %v166, 0.0
    %v169 = vld [vmem:[%s5] sm:$0xff]
    %v170 = vld [vmem:[%s5 + $0x8] sm:$0xff]
    %v171 = vld [vmem:[%s6] sm:$0xff]
    %v172 = vld [vmem:[%s6 + $0x8] sm:$0xff]
    %v174 = vsel %vm119, %v168, 0
    %176 = vmatpush.msra.mxu0 0.0
    %177 = vmatpush.msra.mxu0 0.0
    %178 = vmatpush.msra.mxu0 0.0
    %179 = vmatpush.msra.mxu0 0.0
    %180 = vmatpush.msra.mxu0 0.0
    %181 = vmatpush.msra.mxu0 0.0
    %182 = vmatpush.msra.mxu0 0.0
    %183 = vmatpush.msra.mxu0 0.0
    %184 = vmatpush.msra.mxu0 0.0
    %185 = vmatpush.msra.mxu0 0.0
    %186 = vmatpush.msra.mxu0 0.0
    %187 = vmatpush.msra.mxu0 0.0
    %188 = vmatpush.msra.mxu0 0.0
    %189 = vmatpush.msra.mxu0 0.0
    %190 = vmatpush.msra.mxu0 %v172
    %191 = vmatpush.msra.mxu0 %v171
    %192 = vmatmul.f32.gmra.mxu0 %v174
    %v193 = vpop.f32.mrf.mxu0
    %v194 = vadd.f32 0.0, %v193
    %195 = vdwg.mxu0
    %v197 = vsel %vm119, %v143, 0
    %199 = vmatpush.msra.mxu0 0.0
    %200 = vmatpush.msra.mxu0 0.0
    %201 = vmatpush.msra.mxu0 0.0
    %202 = vmatpush.msra.mxu0 0.0
    %203 = vmatpush.msra.mxu0 0.0
    %204 = vmatpush.msra.mxu0 0.0
    %205 = vmatpush.msra.mxu0 0.0
    %206 = vmatpush.msra.mxu0 0.0
    %207 = vmatpush.msra.mxu0 0.0
    %208 = vmatpush.msra.mxu0 0.0
    %209 = vmatpush.msra.mxu0 0.0
    %210 = vmatpush.msra.mxu0 0.0
    %211 = vmatpush.msra.mxu0 0.0
    %212 = vmatpush.msra.mxu0 0.0
    %213 = vmatpush.msra.mxu0 %v170
    %214 = vmatpush.msra.mxu0 %v169
    %215 = vmatmul.f32.gmra.mxu0 %v197
    %v216 = vpop.f32.mrf.mxu0
    %v217 = vadd.f32 %v194, %v216
    %218 = vdwg.mxu0
    %v219 = vld [vmem:[%s7] sm:$0x1]
    %v221 = vperm.slane %v219, 0
    %v223 = vadd.f32 %v217, %v221
    %v224 = vld [vmem:[%s14] sm:$0xff]
    %v225 = vadd.f32 %v223, %v224
    %vm226 = vcmask 64512
    %v227 = vsel %vm226, %v225, -inf
    %228 = vmax.xlane.f32.xlu0 %v227
    %v229 = vpop.xlane.xlu0 %228
    %v230 = vsub.f32 %v225, %v229
    %v231 = vmul.f32 %v230, 1.442695
    %v232 = vpow.pop %v231
    %v233 = vsel %vm226, %v232, 0.0
    %234 = vadd.xlane.f32.xlu0 %v233
    %v235 = vpop.xlane.xlu0 %234
    %v236 = vrcp.pop %v235
    %v237 = vmul.f32 %v232, %v236
    %v238 = vlaneseq
    %v239 = vand.u32 %v238, 127
    %v240 = vld [vmem:[%s9] sm:$0xff]
    %241 = vset.pattern.permute.xlu0 0
    %242 = vperm.xlu0 %241, %v240
    %v243 = vpop.permute.xlu0 %242
    %vm244 = vcmp.eq.s32.totalorder %v243, %v239
    %v245 = vsel %vm244, 1, 0
    %v246 = vcvt.s32.f32 %v245
    %v247 = vld [vmem:[%s10] sm:$0xff]
    %248 = vset.pattern.permute.xlu0 0
    %249 = vperm.xlu0 %248, %v247
    %v250 = vpop.permute.xlu0 %249
    %vm251 = vcmp.eq.s32.totalorder %v250, %v239
    %v252 = vsel %vm251, 1, 0
    %v253 = vcvt.s32.f32 %v252
    %v254 = vld [vmem:[%s8] sm:$0xff]
    %v255 = vld [vmem:[%s8 + $0x8] sm:$0xff]
    %v256 = vld [vmem:[%s8 + $0x10] sm:$0xff]
    %v257 = vld [vmem:[%s8 + $0x18] sm:$0xff]
    %v258 = vld [vmem:[%s8 + $0x20] sm:$0xff]
    %v259 = vld [vmem:[%s8 + $0x28] sm:$0xff]
    %v260 = vld [vmem:[%s8 + $0x30] sm:$0xff]
    %v261 = vld [vmem:[%s8 + $0x38] sm:$0xff]
    %vm262 = vcmask 523264
    %v264 = vsel %vm262, %v246, 0
    %266 = vmatpush.msra.mxu0 0.0
    %267 = vmatpush.msra.mxu0 0.0
    %268 = vmatpush.msra.mxu0 0.0
    %269 = vmatpush.msra.mxu0 0.0
    %270 = vmatpush.msra.mxu0 0.0
    %271 = vmatpush.msra.mxu0 0.0
    %272 = vmatpush.msra.mxu0 0.0
    %273 = vmatpush.msra.mxu0 0.0
    %274 = vmatpush.msra.mxu0 %v261
    %275 = vmatpush.msra.mxu0 %v260
    %276 = vmatpush.msra.mxu0 %v259
    %277 = vmatpush.msra.mxu0 %v258
    %278 = vmatpush.msra.mxu0 %v257
    %279 = vmatpush.msra.mxu0 %v256
    %280 = vmatpush.msra.mxu0 %v255
    %281 = vmatpush.msra.mxu0 %v254
    %282 = vmatmul.f32.gmra.mxu0 %v264
    %v283 = vpop.f32.mrf.mxu0
    %v284 = vadd.f32 0.0, %v283
    %285 = vdwg.mxu0
    %v287 = vsel %vm262, %v253, 0
    %289 = vmatpush.msra.mxu0 0.0
    %290 = vmatpush.msra.mxu0 0.0
    %291 = vmatpush.msra.mxu0 0.0
    %292 = vmatpush.msra.mxu0 0.0
    %293 = vmatpush.msra.mxu0 0.0
    %294 = vmatpush.msra.mxu0 0.0
    %295 = vmatpush.msra.mxu0 0.0
    %296 = vmatpush.msra.mxu0 0.0
    %297 = vmatpush.msra.mxu0 %v261
    %298 = vmatpush.msra.mxu0 %v260
    %299 = vmatpush.msra.mxu0 %v259
    %300 = vmatpush.msra.mxu0 %v258
    %301 = vmatpush.msra.mxu0 %v257
    %302 = vmatpush.msra.mxu0 %v256
    %303 = vmatpush.msra.mxu0 %v255
    %304 = vmatpush.msra.mxu0 %v254
    %305 = vmatmul.f32.gmra.mxu0 %v287
    %v306 = vpop.f32.mrf.mxu0
    %v307 = vadd.f32 0.0, %v306
    %308 = vdwg.mxu0
    %v309 = vld [vmem:[%s11] sm:$0xff]
    %v310 = vld [vmem:[%s11 + $0x8] sm:$0xff]
    %v311 = vld [vmem:[%s11 + $0x10] sm:$0xff]
    %v312 = vld [vmem:[%s11 + $0x18] sm:$0xff]
    %v313 = vld [vmem:[%s12] sm:$0xff]
    %v314 = vld [vmem:[%s12 + $0x8] sm:$0xff]
    %v315 = vld [vmem:[%s12 + $0x10] sm:$0xff]
    %v316 = vld [vmem:[%s12 + $0x18] sm:$0xff]
    %v318 = vsel %vm84, %v307, 0
    %320 = vmatpush.msra.mxu0 0.0
    %321 = vmatpush.msra.mxu0 0.0
    %322 = vmatpush.msra.mxu0 0.0
    %323 = vmatpush.msra.mxu0 0.0
    %324 = vmatpush.msra.mxu0 0.0
    %325 = vmatpush.msra.mxu0 0.0
    %326 = vmatpush.msra.mxu0 0.0
    %327 = vmatpush.msra.mxu0 0.0
    %328 = vmatpush.msra.mxu0 0.0
    %329 = vmatpush.msra.mxu0 0.0
    %330 = vmatpush.msra.mxu0 0.0
    %331 = vmatpush.msra.mxu0 0.0
    %332 = vmatpush.msra.mxu0 %v316
    %333 = vmatpush.msra.mxu0 %v315
    %334 = vmatpush.msra.mxu0 %v314
    %335 = vmatpush.msra.mxu0 %v313
    %336 = vmatmul.f32.gmra.mxu0 %v318
    %v337 = vpop.f32.mrf.mxu0
    %v338 = vadd.f32 0.0, %v337
    %339 = vdwg.mxu0
    %v341 = vsel %vm84, %v284, 0
    %343 = vmatpush.msra.mxu0 0.0
    %344 = vmatpush.msra.mxu0 0.0
    %345 = vmatpush.msra.mxu0 0.0
    %346 = vmatpush.msra.mxu0 0.0
    %347 = vmatpush.msra.mxu0 0.0
    %348 = vmatpush.msra.mxu0 0.0
    %349 = vmatpush.msra.mxu0 0.0
    %350 = vmatpush.msra.mxu0 0.0
    %351 = vmatpush.msra.mxu0 0.0
    %352 = vmatpush.msra.mxu0 0.0
    %353 = vmatpush.msra.mxu0 0.0
    %354 = vmatpush.msra.mxu0 0.0
    %355 = vmatpush.msra.mxu0 %v312
    %356 = vmatpush.msra.mxu0 %v311
    %357 = vmatpush.msra.mxu0 %v310
    %358 = vmatpush.msra.mxu0 %v309
    %359 = vmatmul.f32.gmra.mxu0 %v341
    %v360 = vpop.f32.mrf.mxu0
    %v361 = vadd.f32 %v338, %v360
    %362 = vdwg.mxu0
    %v363 = vld [vmem:[%s13] sm:$0x1]
    %v365 = vperm.slane %v363, 0
    %v367 = vadd.f32 %v361, %v365
    %v368 = vld [vmem:[%s16] sm:$0xff]
    %v369 = vld [vmem:[%s17] sm:$0xff]
    %v370 = vmul.f32 %v369, 1.442695
    %v371 = vpow.pop %v370
    %v372 = vld [vmem:[%s18] sm:$0xff]
    %v373 = vmul.f32 %v371, %v372
    %v374 = vadd.f32 %v368, %v373
    %v376 = vsel %vm226, %v237, 0
    %378 = vmatpush.msra.mxu0 0.0
    %379 = vmatpush.msra.mxu0 0.0
    %380 = vmatpush.msra.mxu0 0.0
    %381 = vmatpush.msra.mxu0 0.0
    %382 = vmatpush.msra.mxu0 0.0
    %383 = vmatpush.msra.mxu0 0.0
    %384 = vmatpush.msra.mxu0 0.0
    %385 = vmatpush.msra.mxu0 0.0
    %386 = vmatpush.msra.mxu0 0.0
    %387 = vmatpush.msra.mxu0 0.0
    %388 = vmatpush.msra.mxu0 0.0
    %389 = vmatpush.msra.mxu0 0.0
    %390 = vmatpush.msra.mxu0 0.0
    %391 = vmatpush.msra.mxu0 0.0
    %392 = vmatpush.msra.mxu0 0.0
    %393 = vmatpush.msra.mxu0 %v374
    %394 = vmatmul.f32.gmra.mxu0 %v376
    %v395 = vpop.f32.mrf.mxu0
    %v396 = vadd.f32 0.0, %v395
    %397 = vdwg.mxu0
    %v398 = vld [vmem:[%s15] sm:$0xff]
    %v399 = vsub.f32 %v237, %v398
    %v400 = vmul.f32 %v399, %v399
    %v401 = vsel %vm226, %v400, 0.0
    %402 = vadd.xlane.f32.xlu0 %v401
    %v403 = vpop.xlane.xlu0 %402
    %v404 = vrot.slane %v403, 4
    %v405 = vadd.f32 %v403, %v404
    %v406 = vrot.slane %v405, 2
    %v407 = vadd.f32 %v405, %v406
    %v408 = vrot.slane %v407, 1
    %v409 = vadd.f32 %v407, %v408
    %v410 = vrcp.pop 8.0
    %v411 = vmul.f32 8.0, %v410
    %v412 = vsub.f32 1.0, %v411
    %v413 = vmul.f32 %v410, %v412
    %v414 = vadd.f32 %v410, %v413
    %vm415 = vweird.f32 %v410
    %v416 = vsel %vm415, %v410, %v414
    %v417 = vmul.f32 %v409, %v416
    %v418 = vsub.f32 %v367, %v396
    %v419 = vmul.f32 %v418, %v418
    %v420 = vsel %vm119, %v419, 0.0
    %421 = vadd.xlane.f32.xlu0 %v420
    %v422 = vpop.xlane.xlu0 %421
    %v423 = vrcp.pop 16.0
    %v424 = vmul.f32 16.0, %v423
    %v425 = vsub.f32 1.0, %v424
    %v426 = vmul.f32 %v423, %v425
    %v427 = vadd.f32 %v423, %v426
    %vm428 = vweird.f32 %v423
    %v429 = vsel %vm428, %v423, %v427
    %v430 = vmul.f32 %v422, %v429
    %v431 = vrot.slane %v430, 4
    %v432 = vadd.f32 %v430, %v431
    %v433 = vrot.slane %v432, 2
    %v434 = vadd.f32 %v432, %v433
    %v435 = vrot.slane %v434, 1
    %v436 = vadd.f32 %v434, %v435
    %v437 = vmul.f32 %v436, %v416
    %v438 = vld [vmem:[%s19] sm:$0xff]
    %v439 = vld [vmem:[%s19 + $0x8] sm:$0xff]
    %v440 = vld [vmem:[%s20] sm:$0x1]
    %v442 = vperm.slane %v440, 0
    %v445 = vsel %vm119, %v367, 0
    %447 = vmatpush.msra.mxu0 0.0
    %448 = vmatpush.msra.mxu0 0.0
    %449 = vmatpush.msra.mxu0 0.0
    %450 = vmatpush.msra.mxu0 0.0
    %451 = vmatpush.msra.mxu0 0.0
    %452 = vmatpush.msra.mxu0 0.0
    %453 = vmatpush.msra.mxu0 0.0
    %454 = vmatpush.msra.mxu0 0.0
    %455 = vmatpush.msra.mxu0 0.0
    %456 = vmatpush.msra.mxu0 0.0
    %457 = vmatpush.msra.mxu0 0.0
    %458 = vmatpush.msra.mxu0 0.0
    %459 = vmatpush.msra.mxu0 0.0
    %460 = vmatpush.msra.mxu0 0.0
    %461 = vmatpush.msra.mxu0 %v439
    %462 = vmatpush.msra.mxu0 %v438
    %463 = vmatmul.f32.gmra.mxu0 %v445
    %v464 = vpop.f32.mrf.mxu0
    %v465 = vadd.f32 %v442, %v464
    %466 = vdwg.mxu0
    %v467 = vmax.f32 %v465, 0.0
    %v468 = vld [vmem:[%s21] sm:$0xff]
    %v469 = vld [vmem:[%s21 + $0x8] sm:$0xff]
    %v470 = vld [vmem:[%s21 + $0x10] sm:$0xff]
    %v471 = vld [vmem:[%s21 + $0x18] sm:$0xff]
    %v472 = vld [vmem:[%s21 + $0x20] sm:$0xff]
    %v473 = vld [vmem:[%s21 + $0x28] sm:$0xff]
    %v474 = vld [vmem:[%s21 + $0x30] sm:$0xff]
    %v475 = vld [vmem:[%s21 + $0x38] sm:$0xff]
    %v476 = vld [vmem:[%s22] sm:$0x1]
    %v478 = vperm.slane %v476, 0
    %v481 = vsel %vm262, %v467, 0
    %483 = vmatpush.msra.mxu0 0.0
    %484 = vmatpush.msra.mxu0 0.0
    %485 = vmatpush.msra.mxu0 0.0
    %486 = vmatpush.msra.mxu0 0.0
    %487 = vmatpush.msra.mxu0 0.0
    %488 = vmatpush.msra.mxu0 0.0
    %489 = vmatpush.msra.mxu0 0.0
    %490 = vmatpush.msra.mxu0 0.0
    %491 = vmatpush.msra.mxu0 %v475
    %492 = vmatpush.msra.mxu0 %v474
    %493 = vmatpush.msra.mxu0 %v473
    %494 = vmatpush.msra.mxu0 %v472
    %495 = vmatpush.msra.mxu0 %v471
    %496 = vmatpush.msra.mxu0 %v470
    %497 = vmatpush.msra.mxu0 %v469
    %498 = vmatpush.msra.mxu0 %v468
    %499 = vmatmul.f32.gmra.mxu0 %v481
    %v500 = vpop.f32.mrf.mxu0
    %v501 = vadd.f32 %v478, %v500
    %502 = vdwg.mxu0
    %v503 = vld [vmem:[%s23] sm:$0xff]
    %v504 = vsub.f32 %v501, %v503
    %v505 = vmul.f32 %v504, %v504
    %v506 = vsel %vm262, %v505, 0.0
    %507 = vadd.xlane.f32.xlu0 %v506
    %v508 = vpop.xlane.xlu0 %507
    %v509 = vrot.slane %v508, 4
    %v510 = vadd.f32 %v508, %v509
    %v511 = vrot.slane %v510, 2
    %v512 = vadd.f32 %v510, %v511
    %v513 = vrot.slane %v512, 1
    %v514 = vadd.f32 %v512, %v513
    %s515 = vtos %v514
    %v516 = vstv %s515
    %v517 = vrcp.pop 512.0
    %v518 = vmul.f32 512.0, %v517
    %v519 = vsub.f32 1.0, %v518
    %v520 = vmul.f32 %v517, %v519
    %v521 = vadd.f32 %v517, %v520
    %vm522 = vweird.f32 %v517
    %v523 = vsel %vm522, %v517, %v521
    %v524 = vmul.f32 %v516, %v523
    %v525 = vadd.f32 %v524, %v417
    %v526 = vadd.f32 %v525, %v437
    %vm527 = vcmask 0
    %528 = vst.msk [vmem:[#allocation2] sm:$0x1] %vm527, %v526
    // Predicated region
    $region98: #{tpu_custom_call.1} parent=1 // pred_check
      _
    $region99: #{tpu_custom_call.1} parent=1 // pred_check_branch
      %530 = sbr.rel (0) target = $region101
    $region100: #{tpu_custom_call.1} parent=1 // pred_region
      %532 = vsyncadd [#allocation3], 0
      %s534 = sshll.u32 [#allocation2], 4
      %s535 = int_to_ptr.vmem [resolvable:$true] %s534
      %s536 = sshll.u32 %s24, 4
      %s537 = int_to_ptr.hbm [resolvable:$true] %s536
      %539 = dma.vmem_to_hbm [thread:$0]  %s535, 16, %s537, [#allocation3]
    $region101: #{tpu_custom_call.1} parent=1 // pred_fallthru
      _
    // Predicated region
    $region102: #{tpu_custom_call.1} parent=1 // pred_check
      _
    $region103: #{tpu_custom_call.1} parent=1 // pred_check_branch
      %541 = sbr.rel (0) target = $region105
    $region104: #{tpu_custom_call.1} parent=1 // pred_region
      %543 = dma.done [#allocation3], 16
    $region105: #{tpu_custom_call.1} parent=1 // pred_fallthru
      _
    %544 = vsyncpa [#allocation3], 1

</llo_original>
